<compile_context>
chip_gen: v7x
topology: tpu7x:2x2x1
jax: 0.10.0
libtpu: 0.0.40
codegen_flags: <defaults>
</compile_context>

<pallas_src>
import jax
import jax.numpy as jnp
from jax.experimental import pallas as pl
from jax.experimental.pallas import tpu as pltpu


def _round_up(x: int, m: int) -> int:
    return (x + m - 1) // m * m


def _round_down(x: int, m: int) -> int:
    return (x // m) * m


def _tpu_generation() -> str:
    try:
        kind = jax.devices()[0].device_kind.lower()
    except Exception:
        return "unknown"
    if "v7" in kind:
        return "v7x"
    if "v6" in kind:
        return "v6e"
    if "v5" in kind and ("lite" in kind or "5e" in kind):
        return "v5e"
    return "unknown"


def _vmem_capacity_bytes(gen: str) -> int:
    try:
        return int(pltpu.get_tpu_info().vmem_capacity_bytes)
    except Exception:
        return (64 << 20) if gen == "v7x" else (128 << 20)


def _default_tb(gen: str, itemsize: int) -> int:
    # Roughly each generation's HBM-bandwidth / MXU-rate crossover for the
    # one-hot gather (review: v6e bf16 ~640 rows, v7x ~310/TC, v5e ~240).
    if itemsize <= 2:  # bf16 / fp8 / int8 tables: full-rate MXU path
        return {"v5e": 256, "v6e": 512, "v7x": 512}.get(gen, 256)
    return {"v5e": 128, "v6e": 256, "v7x": 256}.get(gen, 256)


def _sublane_rows(dtype) -> int:
    # f32 -> 8, bf16 -> 16, int8/fp8 -> 32 packed rows per sublane group.
    return max(8, 32 // max(1, jnp.dtype(dtype).itemsize))


# -----------------------------------------------------------------------------
# Kernels
# -----------------------------------------------------------------------------
def _embed_kernel_single(tok_ref, emb_ref, out_ref):
    # Whole (padded) vocab in one block: no accumulator, write straight out.
    toks = tok_ref[...]                                          # (TB, 1) int32
    vb = emb_ref.shape[0]
    vocab_ids = jax.lax.broadcasted_iota(jnp.int32, (1, vb), 1)
    # One-hot rows are exactly 0/1, so the matmul is a gather.  Building the
    # one-hot in the table dtype keeps bf16 tables on the fast MXU path.
    onehot = (toks == vocab_ids).astype(emb_ref.dtype)           # (TB, VB)
    out_ref[...] = jnp.dot(
        onehot, emb_ref[...], preferred_element_type=jnp.float32
    ).astype(out_ref.dtype)


def _embed_kernel_tiled(tok_ref, emb_ref, out_ref, acc_ref):
    # tok_ref: (TB, 1)  int32 token-id tile   (constant across the V axis)
    # emb_ref: (VB, E)  streamed table block  (varies along the V axis)
    # out_ref: (TB, E)  output tile           (resident across the V axis)
    # acc_ref: (TB, E)  f32 accumulator scratch
    k = pl.program_id(1)

    @pl.when(k == 0)
    def _init():
        acc_ref[...] = jnp.zeros_like(acc_ref)

    toks = tok_ref[...]                                          # (TB, 1)
    vb = emb_ref.shape[0]
    vocab_ids = jax.lax.broadcasted_iota(jnp.int32, (1, vb), 1) + k * vb
    onehot = (toks == vocab_ids).astype(emb_ref.dtype)           # (TB, VB)
    acc_ref[...] += jnp.dot(
        onehot, emb_ref[...], preferred_element_type=jnp.float32
    )

    @pl.when(k == pl.num_programs(1) - 1)
    def _finalize():
        out_ref[...] = acc_ref[...].astype(out_ref.dtype)


# -----------------------------------------------------------------------------
# Wrapper
# -----------------------------------------------------------------------------
def token_embedding(
    tokens: jax.Array,
    emb_table: jax.Array,
    *,
    tb: int | None = None,
    vb_bytes_target: int | None = None,
    vb_cap: int = 2048,
):
    """Pallas equivalent of TokenEmbedding.forward: emb_table[tokens].

    tokens:    integer array of any shape (e.g. [B, S])
    emb_table: float array of shape [V, E]
    returns:   tokens.shape + (E,), in emb_table's dtype
    """
    V, E = emb_table.shape
    lead_shape = tokens.shape
    N = 1
    for d in lead_shape:
        N *= int(d)
    N = max(N, 1)

    dtype = emb_table.dtype
    itemsize = jnp.dtype(dtype).itemsize
    gen = _tpu_generation()

    # --- embedding-dim padding (lane-dense writebacks) -----------------------
    e_pad = _round_up(E, 128)

    # --- token tiling ---------------------------------------------------------
    if tb is None:
        tb = _default_tb(gen, itemsize)
    tb = max(8, _round_up(int(tb), 8))
    # Keep at least two token tiles so both v7x TensorCores get work (and the
    # pipeline has something to overlap) on small/decode-style shapes.
    n8 = _round_up(N, 8)
    if n8 >= 16:
        tb = min(tb, max(8, _round_down(n8 // 2, 8)))
    n_pad = _round_up(N, tb)

    tok_flat = tokens.reshape(N).astype(jnp.int32)
    if n_pad != N:
        # Padding with id 0 gathers real row 0; those rows are sliced off
        # below — do not remove the final [:N] slice.
        tok_flat = jnp.concatenate(
            [tok_flat, jnp.zeros((n_pad - N,), jnp.int32)]
        )
    tok_2d = tok_flat.reshape(n_pad, 1)

    # --- vocabulary tiling ----------------------------------------------------
    if vb_bytes_target is None:
        vb_bytes_target = (2 << 20) if gen == "v7x" else (4 << 20)
    vb = _round_down(max(vb_bytes_target // max(1, e_pad * itemsize), 128), 128)
    vb = max(128, min(vb, vb_cap))
    v_sub = _round_up(V, _sublane_rows(dtype))
    single_vblock = vb >= v_sub
    if single_vblock:
        vb = v_sub
        v_pad = v_sub
    else:
        v_pad = _round_up(V, vb)

    emb = emb_table
    if v_pad != V or e_pad != E:
        # Zero-pad: padded vocab rows never match a valid id (contribute 0);
        # padded embedding lanes are sliced off below.
        emb = jnp.zeros((v_pad, e_pad), dtype).at[:V, :E].set(emb_table)

    n_tiles = n_pad // tb

    # --- VMEM budget (generation-aware; v7x has only 64 MiB/TC) --------------
    est = (
        2 * vb * e_pad * itemsize                       # table blocks (dbl-buffered)
        + 2 * tb * e_pad * itemsize                     # output tiles (dbl-buffered)
        + (0 if single_vblock else tb * e_pad * 4)      # f32 accumulator scratch
        + 2 * tb * 512                                  # (tb, 1) int32 token tiles
        + tb * vb * 4                                   # one-hot / MXU staging headroom
    )
    vmem_cap = int(0.6 * _vmem_capacity_bytes(gen))     # ~38 MiB v7x, ~76 MiB v5e/v6e
    vmem_limit = int(min(max(2 * est, 32 << 20), vmem_cap))

    # HBM traffic includes the table re-stream once per token tile.
    cost = pl.CostEstimate(
        flops=2 * n_pad * v_pad * e_pad,
        transcendentals=0,
        bytes_accessed=(
            n_pad * 4
            + n_tiles * v_pad * e_pad * itemsize
            + n_pad * e_pad * itemsize
        ),
    )

    if single_vblock:
        kernel = _embed_kernel_single
        grid = (n_tiles,)
        in_specs = [
            pl.BlockSpec((tb, 1), lambda i: (i, 0)),
            pl.BlockSpec((v_pad, e_pad), lambda i: (0, 0)),
        ]
        out_specs = pl.BlockSpec((tb, e_pad), lambda i: (i, 0))
        scratch_shapes = []
        dim_sem = ("parallel",)
    else:
        kernel = _embed_kernel_tiled
        grid = (n_tiles, v_pad // vb)  # V (reduction) axis last, "arbitrary"
        in_specs = [
            # Token tile: index constant across k, fetched once per i.
            pl.BlockSpec((tb, 1), lambda i, k: (i, 0)),
            # Table streamed in (vb, E) blocks along the reduction axis.
            pl.BlockSpec((vb, e_pad), lambda i, k: (k, 0)),
        ]
        # Same output block across k -> accumulator stays resident.
        out_specs = pl.BlockSpec((tb, e_pad), lambda i, k: (i, 0))
        scratch_shapes = [pltpu.VMEM((tb, e_pad), jnp.float32)]
        dim_sem = ("parallel", "arbitrary")

    out = pl.pallas_call(
        kernel,
        out_shape=jax.ShapeDtypeStruct((n_pad, e_pad), dtype),
        grid_spec=pltpu.PrefetchScalarGridSpec(
            num_scalar_prefetch=0,
            grid=grid,
            in_specs=in_specs,
            out_specs=out_specs,
            scratch_shapes=scratch_shapes,
        ),
        compiler_params=pltpu.CompilerParams(
            dimension_semantics=dim_sem,
            vmem_limit_bytes=vmem_limit,
        ),
        cost_estimate=cost,
    )(tok_2d, emb)

    return out[:N, :E].reshape(*lead_shape, E)


if __name__ == "__main__":
    # Deterministic "parameters" and inputs (nn.Embedding default init ~ N(0,1)).
    vocab_size = 64
    emb_size = 128
    batch, seq = 2, 8

    key = jax.random.PRNGKey(0)
    k_emb, k_tok = jax.random.split(key)
    emb_table = jax.random.normal(k_emb, (vocab_size, emb_size), dtype=jnp.float32)
    tokens = jax.random.randint(k_tok, (batch, seq), 0, vocab_size, dtype=jnp.int32)

    out = token_embedding(tokens, emb_table)
    out = jax.block_until_ready(out)

    # Correctness check against plain-JAX gather (== torch nn.Embedding semantics).
    ref = emb_table[tokens]
    assert out.shape == (batch, seq, emb_size)
    assert jnp.allclose(out, ref, atol=1e-5), "mismatch vs reference gather"

    # Also exercise the V-tiled (multi-block, accumulator) path at small scale.
    out_tiled = token_embedding(tokens, emb_table, tb=8, vb_bytes_target=16 * 1024,
                                vb_cap=128)
    out_tiled = jax.block_until_ready(out_tiled)
    assert jnp.allclose(out_tiled, ref, atol=1e-5), "mismatch on V-tiled path"

    print("KERNEL_OK")
</pallas_src>

<mosaic_0001>
module attributes {stable_mosaic.version = 11 : i64} {
  func.func @_embed_kernel_single(%arg0: i32, %arg1: memref<8x1xi32, #tpu.memory_space<vmem>>, %arg2: memref<64x128xf32, #tpu.memory_space<vmem>>, %arg3: memref<8x128xf32, #tpu.memory_space<vmem>>) attributes {dimension_semantics = [#tpu.dimension_semantics<parallel>], iteration_bounds = array<i64: 2>, scalar_prefetch = 0 : i64, scratch_operands = 0 : i64, tpu.core_type = #tpu.core_type<tc>, window_params = [{transform_indices = @transform_0, window_bounds = array<i64: 8, 1>}, {pipeline_mode = #tpu.pipeline_mode<synchronous>, transform_indices = @transform_1, window_bounds = array<i64: 64, 128>}, {transform_indices = @transform_2, window_bounds = array<i64: 8, 128>}]} {
    %c0 = arith.constant 0 : index
    %c0_0 = arith.constant 0 : index
    %0 = vector.load %arg1[%c0, %c0_0] : memref<8x1xi32, #tpu.memory_space<vmem>>, vector<8x1xi32>
    %1 = tpu.iota {dimensions = array<i32: 1>} : vector<1x64xi32>
    %2 = vector.broadcast %0 : vector<8x1xi32> to vector<8x64xi32>
    %3 = vector.broadcast %1 : vector<1x64xi32> to vector<8x64xi32>
    %4 = arith.cmpi eq, %2, %3 : vector<8x64xi32>
    %5 = arith.extui %4 : vector<8x64xi1> to vector<8x64xi32>
    %6 = arith.sitofp %5 : vector<8x64xi32> to vector<8x64xf32>
    %c0_1 = arith.constant 0 : index
    %c0_2 = arith.constant 0 : index
    %7 = vector.load %arg2[%c0_1, %c0_2] : memref<64x128xf32, #tpu.memory_space<vmem>>, vector<64x128xf32>
    %cst = arith.constant dense<0.000000e+00> : vector<8x128xf32>
    %8 = tpu.matmul %6, %7, %cst {dimension_numbers = #tpu.dot_dimension_numbers<[1], [0], [0], [1], [0, 0, 1, 1], [], []>} : vector<8x64xf32>, vector<64x128xf32>, vector<8x128xf32> -> vector<8x128xf32>
    %c0_3 = arith.constant 0 : index
    %c0_4 = arith.constant 0 : index
    %9 = vector.load %arg3[%c0_3, %c0_4] : memref<8x128xf32, #tpu.memory_space<vmem>>, vector<8x128xf32>
    tpu.vector_store %arg3[%c0_3, %c0_4], %8 {strides = array<i32>} : memref<8x128xf32, #tpu.memory_space<vmem>>, vector<8x128xf32>,
    return
  }
  func.func @transform_0(%arg0: i32) -> (i32, i32) {
    %c0_i32 = arith.constant 0 : i32
    %c0_i32_0 = arith.constant 0 : i32
    return %arg0, %c0_i32 : i32, i32
  }
  func.func @transform_1(%arg0: i32) -> (i32, i32) {
    %c0_i32 = arith.constant 0 : i32
    %c0_i32_0 = arith.constant 0 : i32
    %c0_i32_1 = arith.constant 0 : i32
    return %c0_i32, %c0_i32_0 : i32, i32
  }
  func.func @transform_2(%arg0: i32) -> (i32, i32) {
    %c0_i32 = arith.constant 0 : i32
    %c0_i32_0 = arith.constant 0 : i32
    return %arg0, %c0_i32 : i32, i32
  }
}

</mosaic_0001>

<llo_original>
// kernel: tpu_custom_call.1
$region0: #{tpu_custom_call.1}
  #allocation0 [shape = 'u32[]', space=smem, size = 0x4, offset = 0x4, fixed_abs, tag = 'smem constant byte address 0x4 - core index']
  #allocation1 [shape = 'u32[144,128]{1,0:T(1,128)}', space=vmem, size = 0x12000, scoped, tag = 'internal scratch']
  %s0 = inlined_call_operand.vmem [shape: s32[16,1], index: 0, kind: input, shape index: {}]
  %s1 = inlined_call_operand.hbm [shape: f32[64,128], index: 1, kind: input, shape index: {}]
  %s2 = inlined_call_operand.hbm [shape: f32[16,128], index: 2, kind: output, shape index: {}]
  %s3 = sld [smem:[#allocation0]]
  $region45: #{tpu_custom_call.1} parent=0
    _
  %s5 = ssub.s32 1, %s3
  %s6 = scalar_select 0, %s5, %s3
  $region1: #{tpu_custom_call.1} parent=0
    #allocation2 [shape = 'u8[32768]{0}', space=vmem, size = 0x8000, scoped, tag = 'input window, operand 1, single buffered']
    #allocation3 [shape = 's32[2]{0}', space=sflag, size = 0x8, scoped, tag = 'scoped memory for tpu_custom_call.1']
    #allocation4 [shape = 's32[2]{0}', space=sflag, size = 0x8, scoped, tag = 'scoped memory for tpu_custom_call.1']
    #allocation5 [shape = 'u8[8192]{0}', space=vmem, size = 0x2000, scoped, tag = 'output window, operand 0']
    %7 = vsyncpa [#allocation3], 0
    %8 = vsyncpa [#allocation4], 0
    %s9 = scalar_lea.sflag [#allocation4], 1
    %10 = vsyncpa %s9, 0
    loop: start=0, step=1, limit=4
    $region2: #{tpu_custom_call.1} parent=1 // loop_pre_header
      _
    $region3: #{tpu_custom_call.1} parent=1 // loop_header
      %s12 = sphi 0, %s16
      %p13 = scmp.ge.s32.totalorder %s12, 4
      %s22 = sphi 0, %s24
      %s25 = sphi 0, %s22
      %s26 = sphi 0, %s25
      %s42 = sphi 0, %s26
      %s46 = sphi 0, %s46
      %s48 = sphi 0, %s46
      %s49 = sphi 0, %s48
      %s63 = sphi 0, %s49
      %s69 = sphi 0, %s71
      %s72 = sphi 0, %s69
      %s73 = sphi 0, %s72
      %s89 = sphi 0, %s73
    $region4: #{tpu_custom_call.1} parent=1 // loop_header_branch
      %15 = sbr.rel (%p13) target = $region8
    $region5: #{tpu_custom_call.1} parent=1 // loop_body
      %s17 = ssub.s32 %s12, 1
      %s18 = ssub.s32 %s12, 2
      %s19 = sadd.s32 %s12, 1
      %s20 = ssub.s32 %s12, %s19
      %p21 = scmp.eq.s32.totalorder %s20, 0
      %s23 = sadd.s32 %s22, 1
      %s24 = scalar_select %p21, %s22, %s23
      %p27 = pneg %p21
      %p28 = scmp.eq.s32.totalorder %s12, 1
      %p29 = por %p27, %p28
      %p30 = scmp.ne.s32.totalorder %s22, %s25
      %p31 = scmp.eq.s32.totalorder %s12, 0
      %p32 = por %p30, %p31
      %p33 = scmp.ne.s32.totalorder %s22, %s25
      %p34 = scmp.eq.s32.totalorder %s17, 1
      %p35 = por %p33, %p34
      %p36 = scmp.ne.s32.totalorder %s25, %s26
      %p37 = scmp.eq.s32.totalorder %s17, 0
      %p38 = por %p36, %p37
      %p39 = scmp.ne.s32.totalorder %s25, %s26
      %p40 = scmp.eq.s32.totalorder %s18, 1
      %p41 = por %p39, %p40
      %p43 = scmp.ne.s32.totalorder %s26, %s42
      %p44 = scmp.eq.s32.totalorder %s18, 0
      %p45 = por %p43, %p44
      %s47 = sadd.s32 %s46, 1
      %p50 = scmp.eq.s32.totalorder %s12, 1
      %p51 = scmp.ne.s32.totalorder %s46, %s48
      %p52 = scmp.eq.s32.totalorder %s12, 0
      %p53 = por %p51, %p52
      %p54 = scmp.ne.s32.totalorder %s46, %s48
      %p55 = scmp.eq.s32.totalorder %s17, 1
      %p56 = por %p54, %p55
      %p57 = scmp.ne.s32.totalorder %s48, %s49
      %p58 = scmp.eq.s32.totalorder %s17, 0
      %p59 = por %p57, %p58
      %p60 = scmp.ne.s32.totalorder %s48, %s49
      %p61 = scmp.eq.s32.totalorder %s18, 1
      %p62 = por %p60, %p61
      %p64 = scmp.ne.s32.totalorder %s49, %s63
      %p65 = scmp.eq.s32.totalorder %s18, 0
      %p66 = por %p64, %p65
      %s67 = ssub.s32 %s12, %s19
      %p68 = scmp.eq.s32.totalorder %s67, 0
      %s70 = sadd.s32 %s69, 1
      %s71 = scalar_select %p68, %s69, %s70
      %p74 = pneg %p68
      %p75 = scmp.eq.s32.totalorder %s12, 1
      %p76 = por %p74, %p75
      %p77 = scmp.ne.s32.totalorder %s69, %s72
      %p78 = scmp.eq.s32.totalorder %s12, 0
      %p79 = por %p77, %p78
      %p80 = scmp.ne.s32.totalorder %s69, %s72
      %p81 = scmp.eq.s32.totalorder %s17, 1
      %p82 = por %p80, %p81
      %p83 = scmp.ne.s32.totalorder %s72, %s73
      %p84 = scmp.eq.s32.totalorder %s17, 0
      %p85 = por %p83, %p84
      %p86 = scmp.ne.s32.totalorder %s72, %s73
      %p87 = scmp.eq.s32.totalorder %s18, 1
      %p88 = por %p86, %p87
      %p90 = scmp.ne.s32.totalorder %s73, %s89
      %p91 = scmp.eq.s32.totalorder %s18, 0
      %p92 = por %p90, %p91
      %p93 = scmp.le.s32.totalorder 1, %s12
      %p94 = scmp.lt.s32.totalorder %s12, 3
      %p95 = pnand %p93, %p94
      %p96 = pneg %p95
      // Predicated region
      $region9: #{tpu_custom_call.1} parent=5 // pred_check
        _
      $region10: #{tpu_custom_call.1} parent=5 // pred_check_branch
        %98 = sbr.rel (%p95) target = $region12
      $region11: #{tpu_custom_call.1} parent=5 // pred_region
        %s99 = ssub.s32 %s12, 1
        // Predicated region
        $region13: #{tpu_custom_call.1} parent=11 // pred_check
          %p100 = pneg %p59
        $region14: #{tpu_custom_call.1} parent=11 // pred_check_branch
          %102 = sbr.rel (%p100) target = $region16
        $region15: #{tpu_custom_call.1} parent=11 // pred_region
          %s104 = ssub.s32 1024, 1024
          %105 = vsyncadd [#allocation3], %s104
          %s106 = sshll.u32 [#allocation2], 4
          %s107 = int_to_ptr.vmem [resolvable:$true] %s106
          %112 = dma.hbm_to_vmem [thread:$0]  %s1, 1024, %s107, [#allocation3], 128, 128, 8
        $region16: #{tpu_custom_call.1} parent=11 // pred_fallthru
          _
      $region12: #{tpu_custom_call.1} parent=5 // pred_fallthru
        _
      %p113 = scmp.lt.s32.totalorder %s12, 2
      // Predicated region
      $region17: #{tpu_custom_call.1} parent=5 // pred_check
        %p114 = pneg %p113
      $region18: #{tpu_custom_call.1} parent=5 // pred_check_branch
        %116 = sbr.rel (%p114) target = $region20
      $region19: #{tpu_custom_call.1} parent=5 // pred_region
        // Predicated region
        $region21: #{tpu_custom_call.1} parent=19 // pred_check
          %p117 = pneg %p32
        $region22: #{tpu_custom_call.1} parent=19 // pred_check_branch
          %119 = sbr.rel (%p117) target = $region24
        $region23: #{tpu_custom_call.1} parent=19 // pred_region
          %p120 = scmp.lt.s32.totalorder %s12, 1
          %s121 = scalar_select %p120, %s12, 1
          %s122 = smul.addr %s121, 8
          %s123 = scalar_lea.vmem %s0, %s122
        $region24: #{tpu_custom_call.1} parent=19 // pred_fallthru
          _
      $region20: #{tpu_custom_call.1} parent=5 // pred_fallthru
        _
      %p124 = scmp.le.s32.totalorder 1, %s12
      %p125 = scmp.lt.s32.totalorder %s12, 3
      %p126 = pnand %p124, %p125
      %p127 = pneg %p126
      // Predicated region
      $region25: #{tpu_custom_call.1} parent=5 // pred_check
        _
      $region26: #{tpu_custom_call.1} parent=5 // pred_check_branch
        %129 = sbr.rel (%p126) target = $region28
      $region27: #{tpu_custom_call.1} parent=5 // pred_region
        %s130 = ssub.s32 %s12, 1
        // Predicated region
        $region29: #{tpu_custom_call.1} parent=27 // pred_check
          %p131 = pneg %p59
        $region30: #{tpu_custom_call.1} parent=27 // pred_check_branch
          %133 = sbr.rel (%p131) target = $region32
        $region31: #{tpu_custom_call.1} parent=27 // pred_region
          %134 = dma.done [#allocation3], 1024
        $region32: #{tpu_custom_call.1} parent=27 // pred_fallthru
          _
        %p135 = scmp.lt.s32.totalorder %s17, 1
        %s136 = scalar_select %p135, %s17, 1
        %s137 = smul.addr %s136, 8
        %s138 = scalar_lea.vmem %s0, %s137
        %p139 = pneg %p38
        %p140 = pneg %p35
        %p141 = pneg %p59
        %p142 = pneg %p56
        %p143 = pneg %p85
        %p144 = pneg %p82
        %s145 = sand.u32 %s72, 1
        %s146 = scalar_lea.sflag [#allocation4], %s145
        %s147 = sand.u32 %s72, 1
        %s148 = smul.addr %s147, 8
        %s149 = scalar_lea.vmem [#allocation5], %s148
        %p150 = scmp.lt.s32.totalorder %s17, 1
        %s151 = scalar_select %p150, %s17, 1
        %s152 = smul.addr %s151, 8
        %s153 = scalar_lea.vmem %s0, %s152
        %v154 = vld [vmem:[%s153] sm:$0xff]
        %v155 = vlaneseq
        %v156 = vand.u32 %v155, 127
        %157 = vset.pattern.permute.xlu0 0
        %158 = vperm.xlu0 %157, %v154
        %v159 = vpop.permute.xlu0 %158
        %vm160 = vcmp.eq.s32.totalorder %v159, %v156
        %v161 = vsel %vm160, 1, 0
        %v162 = vcvt.s32.f32 %v161
        %v163 = vld [vmem:[#allocation2] sm:$0xff]
        %v164 = vld [vmem:[#allocation2 + $0x8] sm:$0xff]
        %v165 = vld [vmem:[#allocation2 + $0x10] sm:$0xff]
        %v166 = vld [vmem:[#allocation2 + $0x18] sm:$0xff]
        %v167 = vld [vmem:[#allocation2 + $0x20] sm:$0xff]
        %v168 = vld [vmem:[#allocation2 + $0x28] sm:$0xff]
        %v169 = vld [vmem:[#allocation2 + $0x30] sm:$0xff]
        %v170 = vld [vmem:[#allocation2 + $0x38] sm:$0xff]
        %vm171 = vcmask 523264
        %v173 = vsel %vm171, %v162, 0
        %175 = vmatprep.subr.mxu0 0.0
        %176 = vmatpush1.msra.mxu0 %v163
        %177 = vmatprep.subr.mxu0 0.0
        %178 = vmatpush1.msra.mxu0 %v164
        %179 = vmatprep.subr.mxu0 0.0
        %180 = vmatpush1.msra.mxu0 %v165
        %181 = vmatprep.subr.mxu0 0.0
        %182 = vmatpush1.msra.mxu0 %v166
        %183 = vmatprep.subr.mxu0 0.0
        %184 = vmatpush1.msra.mxu0 %v167
        %185 = vmatprep.subr.mxu0 0.0
        %186 = vmatpush1.msra.mxu0 %v168
        %187 = vmatprep.subr.mxu0 0.0
        %188 = vmatpush1.msra.mxu0 %v169
        %189 = vmatprep.subr.mxu0 0.0
        %190 = vmatpush1.msra.mxu0 %v170
        %191 = vmatprep.subr.mxu0 0.0
        %192 = vmatpush1.msra.mxu0 0.0
        %193 = vmatprep.subr.mxu0 0.0
        %194 = vmatpush1.msra.mxu0 0.0
        %195 = vmatprep.subr.mxu0 0.0
        %196 = vmatpush1.msra.mxu0 0.0
        %197 = vmatprep.subr.mxu0 0.0
        %198 = vmatpush1.msra.mxu0 0.0
        %199 = vmatprep.subr.mxu0 0.0
        %200 = vmatpush1.msra.mxu0 0.0
        %201 = vmatprep.subr.mxu0 0.0
        %202 = vmatpush1.msra.mxu0 0.0
        %203 = vmatprep.subr.mxu0 0.0
        %204 = vmatpush1.msra.mxu0 0.0
        %205 = vmatprep.subr.mxu0 0.0
        %206 = vmatpush1.msra.mxu0 0.0
        %207 = vmatprep.subr.mxu0 0.0
        %208 = vmatpush1.msra.mxu0 0.0
        %209 = vmatprep.subr.mxu0 0.0
        %210 = vmatpush1.msra.mxu0 0.0
        %211 = vmatprep.subr.mxu0 0.0
        %212 = vmatpush1.msra.mxu0 0.0
        %213 = vmatprep.subr.mxu0 0.0
        %214 = vmatpush1.msra.mxu0 0.0
        %215 = vmatprep.subr.mxu0 0.0
        %216 = vmatpush1.msra.mxu0 0.0
        %217 = vmatprep.subr.mxu0 0.0
        %218 = vmatpush1.msra.mxu0 0.0
        %219 = vmatprep.subr.mxu0 0.0
        %220 = vmatpush1.msra.mxu0 0.0
        %221 = vmatprep.subr.mxu0 0.0
        %222 = vmatpush1.msra.mxu0 0.0
        %223 = vmatprep.subr.mxu0 0.0
        %224 = vmatpush1.msra.mxu0 0.0
        %225 = vmatprep.subr.mxu0 0.0
        %226 = vmatpush1.msra.mxu0 0.0
        %227 = vmatprep.subr.mxu0 0.0
        %228 = vmatpush1.msra.mxu0 0.0
        %229 = vmatprep.subr.mxu0 0.0
        %230 = vmatpush1.msra.mxu0 0.0
        %231 = vmatprep.subr.mxu0 0.0
        %232 = vmatpush1.msra.mxu0 0.0
        %233 = vmatprep.subr.mxu0 0.0
        %234 = vmatpush1.msra.mxu0 0.0
        %235 = vmatprep.subr.mxu0 0.0
        %236 = vmatpush1.msra.mxu0 0.0
        %237 = vmatprep.subr.mxu0 0.0
        %238 = vmatpush1.msra.mxu0 0.0
        %239 = vmatprep.mubr.f32.mxu0 0.0
        %240 = vmatmul.mubr.f32.gmra.mrb[0].mxu0 %v173
        %v241 = vpop.f32.mrb[0].mxu0
        %v242 = vadd.f32 0.0, %v241
        %v243 = vpop.f32.mrb[0].mxu0
        %244 = vdwg.mxu0
        %245 = vst [vmem:[%s149] sm:$0xff] %v242
        %s246 = sand.u32 %s72, 1
        %s247 = scalar_lea.sflag [#allocation4], %s246
        %s248 = sand.u32 %s72, 1
        %s249 = smul.addr %s248, 8
        %s250 = scalar_lea.vmem [#allocation5], %s249
        // Predicated region
        $region33: #{tpu_custom_call.1} parent=27 // pred_check
          %p251 = pneg %p82
        $region34: #{tpu_custom_call.1} parent=27 // pred_check_branch
          %253 = sbr.rel (%p251) target = $region36
        $region35: #{tpu_custom_call.1} parent=27 // pred_region
          %s255 = ssub.s32 128, 128
          %256 = vsyncadd %s247, %s255
          %s257 = smul.addr %s17, 128
          %s258 = scalar_lea.hbm %s2, %s257
          %s260 = sshll.u32 %s250, 4
          %s261 = int_to_ptr.vmem [resolvable:$true] %s260
          %263 = dma.vmem_to_hbm [thread:$0]  %s261, 128, %s258, %s247
        $region36: #{tpu_custom_call.1} parent=27 // pred_fallthru
          _
      $region28: #{tpu_custom_call.1} parent=5 // pred_fallthru
        _
      %p264 = scmp.le.s32.totalorder 2, %s12
      // Predicated region
      $region37: #{tpu_custom_call.1} parent=5 // pred_check
        %p265 = pneg %p264
      $region38: #{tpu_custom_call.1} parent=5 // pred_check_branch
        %267 = sbr.rel (%p265) target = $region40
      $region39: #{tpu_custom_call.1} parent=5 // pred_region
        %s268 = ssub.s32 %s12, 2
        // Predicated region
        $region41: #{tpu_custom_call.1} parent=39 // pred_check
          %p269 = pneg %p88
        $region42: #{tpu_custom_call.1} parent=39 // pred_check_branch
          %271 = sbr.rel (%p269) target = $region44
        $region43: #{tpu_custom_call.1} parent=39 // pred_region
          %s272 = sand.u32 %s73, 1
          %s273 = scalar_lea.sflag [#allocation4], %s272
          %s274 = sand.u32 %s73, 1
          %s275 = smul.addr %s274, 8
          %s276 = scalar_lea.vmem [#allocation5], %s275
          %277 = dma.done %s273, 128
        $region44: #{tpu_custom_call.1} parent=39 // pred_fallthru
          _
      $region40: #{tpu_custom_call.1} parent=5 // pred_fallthru
        _
    $region6: #{tpu_custom_call.1} parent=1 // loop_footer
      %s16 = sadd.s32 1, %s12
    $region7: #{tpu_custom_call.1} parent=1 // loop_footer_branch
      %11 = sbr.rel target = $region3
    $region8: #{tpu_custom_call.1} parent=1 // loop_exit
      _
    %278 = vsyncpa [#allocation3], 1
    %s279 = scalar_lea.sflag [#allocation3], 1
    %280 = vsyncpa %s279, 1
    %281 = vsyncpa [#allocation4], 1
    %s282 = scalar_lea.sflag [#allocation4], 1
    %283 = vsyncpa %s282, 1

</llo_original>
